<compile_context>
chip_gen: v7x
topology: tpu7x:2x2x1
jax: 0.10.0
libtpu: 0.0.40
codegen_flags: <defaults>
</compile_context>

<pallas_src>
import jax
import jax.numpy as jnp
from jax.experimental import pallas as pl
from jax.experimental.pallas import tpu as pltpu

H = 128  # lane-dense padded width for input/hidden/output features


def mlp_kernel(x_ref, w_ref, b_ref, o_ref):
    # x_ref: (TILE_B, 128)   w_ref: (384, 128)   b_ref: (3, 128)   o_ref: (TILE_B, 128)
    x = x_ref[...]
    w1 = w_ref[0:H, :]          # static ref slices: zero runtime cost
    w2 = w_ref[H:2 * H, :]
    w3 = w_ref[2 * H:3 * H, :]

    h1 = jnp.dot(x, w1, preferred_element_type=jnp.float32) + b_ref[0:1, :]
    h1 = jnp.maximum(h1, 0.0)                       # ReLU on VPU (lane-dense)
    h2 = jnp.dot(h1, w2, preferred_element_type=jnp.float32) + b_ref[1:2, :]
    h2 = jnp.maximum(h2, 0.0)
    out = jnp.dot(h2, w3, preferred_element_type=jnp.float32) + b_ref[2:3, :]
    o_ref[...] = out.astype(o_ref.dtype)            # unmasked 128-lane store


def _round_up(n, m):
    return ((n + m - 1) // m) * m


def mlp_forward(x, w1, b1, w2, b2, w3, b3, *, max_tile_b=512):
    """x: (B, 8) f32; w_i: (in, out); b_i: (1, out). Returns (B, 1) f32."""
    B, d_in = x.shape
    d_h = w1.shape[1]      # 100
    d_out = w3.shape[1]    # 1

    # --- lane-dense zero padding (exact: 0-rows/cols contribute exact zeros) ---
    f32 = jnp.float32
    w1p = jnp.zeros((H, H), f32).at[:d_in, :d_h].set(w1.astype(f32))
    w2p = jnp.zeros((H, H), f32).at[:d_h, :d_h].set(w2.astype(f32))
    w3p = jnp.zeros((H, H), f32).at[:d_h, :d_out].set(w3.astype(f32))
    b1p = jnp.zeros((1, H), f32).at[:, :d_h].set(b1.astype(f32))
    b2p = jnp.zeros((1, H), f32).at[:, :d_h].set(b2.astype(f32))
    b3p = jnp.zeros((1, H), f32).at[:, :d_out].set(b3.astype(f32))

    # Consolidate into two slabs -> fewer DMA descriptors / semaphore waits.
    w_slab = jnp.concatenate([w1p, w2p, w3p], axis=0)   # (384, 128)
    b_slab = jnp.concatenate([b1p, b2p, b3p], axis=0)   # (3, 128)

    # Batch tiling: sublane-aligned, parallel grid (megacore / v7x dual-TC).
    tile_b = min(_round_up(B, 8), max_tile_b)
    Bp = _round_up(B, tile_b)
    xp = jnp.zeros((Bp, H), f32).at[:B, :d_in].set(x.astype(f32))

    grid = (Bp // tile_b,)

    flops = 2 * B * (d_in * d_h + d_h * d_h + d_h * d_out)
    bytes_accessed = 4 * (xp.size + w_slab.size + b_slab.size + Bp * H)

    # TODO(synk): for large batches on v6e/v7x, cast x/w_slab to bf16 (keep
    # preferred_element_type=f32) to halve DMA bytes and use the bf16 MXU path.
    out = pl.pallas_call(
        mlp_kernel,
        out_shape=jax.ShapeDtypeStruct((Bp, H), jnp.float32),
        grid=grid,
        in_specs=[
            pl.BlockSpec((tile_b, H), lambda i: (i, 0)),    # x tile (streams over batch)
            pl.BlockSpec((3 * H, H), lambda i: (0, 0)),     # weight slab, resident
            pl.BlockSpec((3, H), lambda i: (0, 0)),         # bias slab, resident
        ],
        out_specs=pl.BlockSpec((tile_b, H), lambda i: (i, 0)),
        compiler_params=pltpu.CompilerParams(
            dimension_semantics=("parallel",)),
        cost_estimate=pl.CostEstimate(
            flops=flops, transcendentals=0, bytes_accessed=bytes_accessed),
    )(xp, w_slab, b_slab)

    return out[:B, :d_out]


def init_linear(key, fan_in, fan_out):
    # Deterministic init mirroring PyTorch nn.Linear default: U(-1/sqrt(fan_in), 1/sqrt(fan_in)).
    kw, kb = jax.random.split(key)
    bound = 1.0 / jnp.sqrt(float(fan_in))
    w = jax.random.uniform(kw, (fan_in, fan_out), jnp.float32, -bound, bound)
    b = jax.random.uniform(kb, (1, fan_out), jnp.float32, -bound, bound)
    return w, b


if __name__ == "__main__":
    key = jax.random.PRNGKey(0)
    kx, k1, k2, k3 = jax.random.split(key, 4)

    B = 8  # small batch consistent with the module's 8-feature input
    x = jax.random.normal(kx, (B, 8), jnp.float32)

    w1, b1 = init_linear(k1, 8, 100)
    w2, b2 = init_linear(k2, 100, 100)
    w3, b3 = init_linear(k3, 100, 1)

    out = mlp_forward(x, w1, b1, w2, b2, w3, b3)
    jax.block_until_ready(out)

    # Pure-JAX reference check
    ref = jnp.maximum(x @ w1 + b1, 0.0)
    ref = jnp.maximum(ref @ w2 + b2, 0.0)
    ref = ref @ w3 + b3
    assert out.shape == (B, 1)
    assert jnp.allclose(out, ref, atol=1e-4, rtol=1e-4), (
        float(jnp.max(jnp.abs(out - ref))))

    print("KERNEL_OK")
</pallas_src>

<mosaic_0001>
module attributes {stable_mosaic.version = 11 : i64} {
  func.func @mlp_kernel(%arg0: i32, %arg1: memref<8x128xf32, #tpu.memory_space<vmem>>, %arg2: memref<384x128xf32, #tpu.memory_space<vmem>>, %arg3: memref<3x128xf32, #tpu.memory_space<vmem>>, %arg4: memref<8x128xf32, #tpu.memory_space<vmem>>) attributes {dimension_semantics = [#tpu.dimension_semantics<parallel>], iteration_bounds = array<i64: 1>, scalar_prefetch = 0 : i64, scratch_operands = 0 : i64, tpu.core_type = #tpu.core_type<tc>, window_params = [{transform_indices = @transform_0, window_bounds = array<i64: 8, 128>}, {pipeline_mode = #tpu.pipeline_mode<synchronous>, transform_indices = @transform_1, window_bounds = array<i64: 384, 128>}, {pipeline_mode = #tpu.pipeline_mode<synchronous>, transform_indices = @transform_2, window_bounds = array<i64: 3, 128>}, {transform_indices = @transform_3, window_bounds = array<i64: 8, 128>}]} {
    %c0 = arith.constant 0 : index
    %c0_0 = arith.constant 0 : index
    %0 = vector.load %arg1[%c0, %c0_0] : memref<8x128xf32, #tpu.memory_space<vmem>>, vector<8x128xf32>
    %c0_1 = arith.constant 0 : index
    %c0_2 = arith.constant 0 : index
    %1 = vector.load %arg2[%c0_1, %c0_2] : memref<384x128xf32, #tpu.memory_space<vmem>>, vector<128x128xf32>
    %c128 = arith.constant 128 : index
    %c0_3 = arith.constant 0 : index
    %2 = vector.load %arg2[%c128, %c0_3] : memref<384x128xf32, #tpu.memory_space<vmem>>, vector<128x128xf32>
    %c256 = arith.constant 256 : index
    %c0_4 = arith.constant 0 : index
    %3 = vector.load %arg2[%c256, %c0_4] : memref<384x128xf32, #tpu.memory_space<vmem>>, vector<128x128xf32>
    %cst = arith.constant dense<0.000000e+00> : vector<8x128xf32>
    %4 = tpu.matmul %0, %1, %cst {dimension_numbers = #tpu.dot_dimension_numbers<[1], [0], [0], [1], [0, 0, 1, 1], [], []>} : vector<8x128xf32>, vector<128x128xf32>, vector<8x128xf32> -> vector<8x128xf32>
    %c0_5 = arith.constant 0 : index
    %c0_6 = arith.constant 0 : index
    %5 = vector.load %arg3[%c0_5, %c0_6] : memref<3x128xf32, #tpu.memory_space<vmem>>, vector<1x128xf32>
    %6 = vector.broadcast %5 : vector<1x128xf32> to vector<8x128xf32>
    %7 = arith.addf %4, %6 : vector<8x128xf32>
    %cst_7 = arith.constant 0.000000e+00 : f32
    %8 = vector.broadcast %cst_7 : f32 to vector<8x128xf32>
    %9 = arith.maximumf %7, %8 : vector<8x128xf32>
    %cst_8 = arith.constant dense<0.000000e+00> : vector<8x128xf32>
    %10 = tpu.matmul %9, %2, %cst_8 {dimension_numbers = #tpu.dot_dimension_numbers<[1], [0], [0], [1], [0, 0, 1, 1], [], []>} : vector<8x128xf32>, vector<128x128xf32>, vector<8x128xf32> -> vector<8x128xf32>
    %c1 = arith.constant 1 : index
    %c0_9 = arith.constant 0 : index
    %11 = vector.load %arg3[%c1, %c0_9] : memref<3x128xf32, #tpu.memory_space<vmem>>, vector<1x128xf32>
    %12 = vector.broadcast %11 : vector<1x128xf32> to vector<8x128xf32>
    %13 = arith.addf %10, %12 : vector<8x128xf32>
    %cst_10 = arith.constant 0.000000e+00 : f32
    %14 = vector.broadcast %cst_10 : f32 to vector<8x128xf32>
    %15 = arith.maximumf %13, %14 : vector<8x128xf32>
    %cst_11 = arith.constant dense<0.000000e+00> : vector<8x128xf32>
    %16 = tpu.matmul %15, %3, %cst_11 {dimension_numbers = #tpu.dot_dimension_numbers<[1], [0], [0], [1], [0, 0, 1, 1], [], []>} : vector<8x128xf32>, vector<128x128xf32>, vector<8x128xf32> -> vector<8x128xf32>
    %c2 = arith.constant 2 : index
    %c0_12 = arith.constant 0 : index
    %17 = vector.load %arg3[%c2, %c0_12] : memref<3x128xf32, #tpu.memory_space<vmem>>, vector<1x128xf32>
    %18 = vector.broadcast %17 : vector<1x128xf32> to vector<8x128xf32>
    %19 = arith.addf %16, %18 : vector<8x128xf32>
    %c0_13 = arith.constant 0 : index
    %c0_14 = arith.constant 0 : index
    %20 = vector.load %arg4[%c0_13, %c0_14] : memref<8x128xf32, #tpu.memory_space<vmem>>, vector<8x128xf32>
    tpu.vector_store %arg4[%c0_13, %c0_14], %19 {strides = array<i32>} : memref<8x128xf32, #tpu.memory_space<vmem>>, vector<8x128xf32>,
    return
  }
  func.func @transform_0(%arg0: i32) -> (i32, i32) {
    %c0_i32 = arith.constant 0 : i32
    %c0_i32_0 = arith.constant 0 : i32
    return %arg0, %c0_i32 : i32, i32
  }
  func.func @transform_1(%arg0: i32) -> (i32, i32) {
    %c0_i32 = arith.constant 0 : i32
    %c0_i32_0 = arith.constant 0 : i32
    %c0_i32_1 = arith.constant 0 : i32
    return %c0_i32, %c0_i32_0 : i32, i32
  }
  func.func @transform_2(%arg0: i32) -> (i32, i32) {
    %c0_i32 = arith.constant 0 : i32
    %c0_i32_0 = arith.constant 0 : i32
    %c0_i32_1 = arith.constant 0 : i32
    return %c0_i32, %c0_i32_0 : i32, i32
  }
  func.func @transform_3(%arg0: i32) -> (i32, i32) {
    %c0_i32 = arith.constant 0 : i32
    %c0_i32_0 = arith.constant 0 : i32
    return %arg0, %c0_i32 : i32, i32
  }
}

</mosaic_0001>

<llo_original>
// kernel: tpu_custom_call.1
$region0: #{tpu_custom_call.1}
  #allocation0 [shape = 'u32[]', space=smem, size = 0x4, offset = 0x4, fixed_abs, tag = 'smem constant byte address 0x4 - core index']
  #allocation1 [shape = 'u32[144,128]{1,0:T(1,128)}', space=vmem, size = 0x12000, scoped, tag = 'internal scratch']
  %s0 = inlined_call_operand.hbm [shape: f32[8,128], index: 0, kind: input, shape index: {}]
  %s1 = inlined_call_operand.hbm [shape: f32[384,128], index: 1, kind: input, shape index: {}]
  %s2 = inlined_call_operand.vmem [shape: f32[3,128], index: 2, kind: input, shape index: {}]
  %s3 = inlined_call_operand.hbm [shape: f32[8,128], index: 3, kind: output, shape index: {}]
  %s4 = sld [smem:[#allocation0]]
  $region30: #{tpu_custom_call.1} parent=0
    _
  %s6 = ssub.s32 1, %s4
  %s7 = scalar_select 0, %s6, %s4
  $region1: #{tpu_custom_call.1} parent=0
    #allocation2 [shape = 'u8[4096]{0}', space=vmem, size = 0x1000, scoped, tag = 'input window, operand 0, single buffered']
    #allocation3 [shape = 's32[1]{0}', space=sflag, size = 0x4, scoped, tag = 'scoped memory for tpu_custom_call.1']
    #allocation4 [shape = 's32[1]{0}', space=sflag, size = 0x4, scoped, tag = 'scoped memory for tpu_custom_call.1']
    #allocation5 [shape = 'u8[196608]{0}', space=vmem, size = 0x30000, scoped, tag = 'input window, operand 1, single buffered']
    #allocation6 [shape = 's32[1]{0}', space=sflag, size = 0x4, scoped, tag = 'scoped memory for tpu_custom_call.1']
    #allocation7 [shape = 'u8[4096]{0}', space=vmem, size = 0x1000, scoped, tag = 'output window, operand 0, single buffered']
    %8 = vsyncpa [#allocation3], 0
    %9 = vsyncpa [#allocation6], 0
    %10 = vsyncpa [#allocation4], 0
    // Predicated region
    $region2: #{tpu_custom_call.1} parent=1 // pred_check
      _
    $region3: #{tpu_custom_call.1} parent=1 // pred_check_branch
      %12 = sbr.rel (0) target = $region5
    $region4: #{tpu_custom_call.1} parent=1 // pred_region
      %s14 = ssub.s32 128, 128
      %15 = vsyncadd [#allocation3], %s14
      %s17 = sshll.u32 [#allocation2], 4
      %s18 = int_to_ptr.vmem [resolvable:$true] %s17
      %20 = dma.hbm_to_vmem [thread:$0]  %s0, 128, %s18, [#allocation3]
    $region5: #{tpu_custom_call.1} parent=1 // pred_fallthru
      _
    // Predicated region
    $region6: #{tpu_custom_call.1} parent=1 // pred_check
      _
    $region7: #{tpu_custom_call.1} parent=1 // pred_check_branch
      %22 = sbr.rel (0) target = $region9
    $region8: #{tpu_custom_call.1} parent=1 // pred_region
      %s24 = ssub.s32 6144, 6144
      %25 = vsyncadd [#allocation6], %s24
      %s26 = sshll.u32 [#allocation5], 4
      %s27 = int_to_ptr.vmem [resolvable:$true] %s26
      %32 = dma.hbm_to_vmem [thread:$0]  %s1, 6144, %s27, [#allocation6], 128, 128, 8
    $region9: #{tpu_custom_call.1} parent=1 // pred_fallthru
      _
    // Predicated region
    $region10: #{tpu_custom_call.1} parent=1 // pred_check
      _
    $region11: #{tpu_custom_call.1} parent=1 // pred_check_branch
      %34 = sbr.rel (0) target = $region13
    $region12: #{tpu_custom_call.1} parent=1 // pred_region
      _
    $region13: #{tpu_custom_call.1} parent=1 // pred_fallthru
      _
    // Predicated region
    $region14: #{tpu_custom_call.1} parent=1 // pred_check
      _
    $region15: #{tpu_custom_call.1} parent=1 // pred_check_branch
      %36 = sbr.rel (0) target = $region17
    $region16: #{tpu_custom_call.1} parent=1 // pred_region
      %37 = dma.done [#allocation3], 128
    $region17: #{tpu_custom_call.1} parent=1 // pred_fallthru
      _
    // Predicated region
    $region18: #{tpu_custom_call.1} parent=1 // pred_check
      _
    $region19: #{tpu_custom_call.1} parent=1 // pred_check_branch
      %39 = sbr.rel (0) target = $region21
    $region20: #{tpu_custom_call.1} parent=1 // pred_region
      %40 = dma.done [#allocation6], 6144
    $region21: #{tpu_custom_call.1} parent=1 // pred_fallthru
      _
    %v41 = vld [vmem:[#allocation2] sm:$0xff]
    %v42 = vld [vmem:[#allocation5] sm:$0xff]
    %v43 = vld [vmem:[#allocation5 + $0x8] sm:$0xff]
    %v44 = vld [vmem:[#allocation5 + $0x10] sm:$0xff]
    %v45 = vld [vmem:[#allocation5 + $0x18] sm:$0xff]
    %v46 = vld [vmem:[#allocation5 + $0x20] sm:$0xff]
    %v47 = vld [vmem:[#allocation5 + $0x28] sm:$0xff]
    %v48 = vld [vmem:[#allocation5 + $0x30] sm:$0xff]
    %v49 = vld [vmem:[#allocation5 + $0x38] sm:$0xff]
    %v50 = vld [vmem:[#allocation5 + $0x40] sm:$0xff]
    %v51 = vld [vmem:[#allocation5 + $0x48] sm:$0xff]
    %v52 = vld [vmem:[#allocation5 + $0x50] sm:$0xff]
    %v53 = vld [vmem:[#allocation5 + $0x58] sm:$0xff]
    %v54 = vld [vmem:[#allocation5 + $0x60] sm:$0xff]
    %v55 = vld [vmem:[#allocation5 + $0x68] sm:$0xff]
    %v56 = vld [vmem:[#allocation5 + $0x70] sm:$0xff]
    %v57 = vld [vmem:[#allocation5 + $0x78] sm:$0xff]
    %v58 = vld [vmem:[#allocation5 + $0x80] sm:$0xff]
    %v59 = vld [vmem:[#allocation5 + $0x88] sm:$0xff]
    %v60 = vld [vmem:[#allocation5 + $0x90] sm:$0xff]
    %v61 = vld [vmem:[#allocation5 + $0x98] sm:$0xff]
    %v62 = vld [vmem:[#allocation5 + $0xa0] sm:$0xff]
    %v63 = vld [vmem:[#allocation5 + $0xa8] sm:$0xff]
    %v64 = vld [vmem:[#allocation5 + $0xb0] sm:$0xff]
    %v65 = vld [vmem:[#allocation5 + $0xb8] sm:$0xff]
    %v66 = vld [vmem:[#allocation5 + $0xc0] sm:$0xff]
    %v67 = vld [vmem:[#allocation5 + $0xc8] sm:$0xff]
    %v68 = vld [vmem:[#allocation5 + $0xd0] sm:$0xff]
    %v69 = vld [vmem:[#allocation5 + $0xd8] sm:$0xff]
    %v70 = vld [vmem:[#allocation5 + $0xe0] sm:$0xff]
    %v71 = vld [vmem:[#allocation5 + $0xe8] sm:$0xff]
    %v72 = vld [vmem:[#allocation5 + $0xf0] sm:$0xff]
    %v73 = vld [vmem:[#allocation5 + $0xf8] sm:$0xff]
    %v74 = vld [vmem:[#allocation5 + $0x100] sm:$0xff]
    %v75 = vld [vmem:[#allocation5 + $0x108] sm:$0xff]
    %v76 = vld [vmem:[#allocation5 + $0x110] sm:$0xff]
    %v77 = vld [vmem:[#allocation5 + $0x118] sm:$0xff]
    %v78 = vld [vmem:[#allocation5 + $0x120] sm:$0xff]
    %v79 = vld [vmem:[#allocation5 + $0x128] sm:$0xff]
    %v80 = vld [vmem:[#allocation5 + $0x130] sm:$0xff]
    %v81 = vld [vmem:[#allocation5 + $0x138] sm:$0xff]
    %v82 = vld [vmem:[#allocation5 + $0x140] sm:$0xff]
    %v83 = vld [vmem:[#allocation5 + $0x148] sm:$0xff]
    %v84 = vld [vmem:[#allocation5 + $0x150] sm:$0xff]
    %v85 = vld [vmem:[#allocation5 + $0x158] sm:$0xff]
    %v86 = vld [vmem:[#allocation5 + $0x160] sm:$0xff]
    %v87 = vld [vmem:[#allocation5 + $0x168] sm:$0xff]
    %v88 = vld [vmem:[#allocation5 + $0x170] sm:$0xff]
    %v89 = vld [vmem:[#allocation5 + $0x178] sm:$0xff]
    %v90 = vld [vmem:[%s2] sm:$0x1]
    %v91 = vlaneseq
    %v92 = vshrl.u32 %v91, 7
    %v93 = vsub.s32 0, %v92
    %v94 = vrot.slane %v90, %v93
    %95 = vmatprep.subr.mxu0 0.0
    %96 = vmatpush1.msra.mxu0 %v42
    %97 = vmatprep.subr.mxu0 0.0
    %98 = vmatpush1.msra.mxu0 %v43
    %99 = vmatprep.subr.mxu0 0.0
    %100 = vmatpush1.msra.mxu0 %v44
    %101 = vmatprep.subr.mxu0 0.0
    %102 = vmatpush1.msra.mxu0 %v45
    %103 = vmatprep.subr.mxu0 0.0
    %104 = vmatpush1.msra.mxu0 %v46
    %105 = vmatprep.subr.mxu0 0.0
    %106 = vmatpush1.msra.mxu0 %v47
    %107 = vmatprep.subr.mxu0 0.0
    %108 = vmatpush1.msra.mxu0 %v48
    %109 = vmatprep.subr.mxu0 0.0
    %110 = vmatpush1.msra.mxu0 %v49
    %111 = vmatprep.subr.mxu0 0.0
    %112 = vmatpush1.msra.mxu0 %v50
    %113 = vmatprep.subr.mxu0 0.0
    %114 = vmatpush1.msra.mxu0 %v51
    %115 = vmatprep.subr.mxu0 0.0
    %116 = vmatpush1.msra.mxu0 %v52
    %117 = vmatprep.subr.mxu0 0.0
    %118 = vmatpush1.msra.mxu0 %v53
    %119 = vmatprep.subr.mxu0 0.0
    %120 = vmatpush1.msra.mxu0 %v54
    %121 = vmatprep.subr.mxu0 0.0
    %122 = vmatpush1.msra.mxu0 %v55
    %123 = vmatprep.subr.mxu0 0.0
    %124 = vmatpush1.msra.mxu0 %v56
    %125 = vmatprep.subr.mxu0 0.0
    %126 = vmatpush1.msra.mxu0 %v57
    %127 = vmatprep.subr.mxu0 0.0
    %128 = vmatpush1.msra.mxu0 0.0
    %129 = vmatprep.subr.mxu0 0.0
    %130 = vmatpush1.msra.mxu0 0.0
    %131 = vmatprep.subr.mxu0 0.0
    %132 = vmatpush1.msra.mxu0 0.0
    %133 = vmatprep.subr.mxu0 0.0
    %134 = vmatpush1.msra.mxu0 0.0
    %135 = vmatprep.subr.mxu0 0.0
    %136 = vmatpush1.msra.mxu0 0.0
    %137 = vmatprep.subr.mxu0 0.0
    %138 = vmatpush1.msra.mxu0 0.0
    %139 = vmatprep.subr.mxu0 0.0
    %140 = vmatpush1.msra.mxu0 0.0
    %141 = vmatprep.subr.mxu0 0.0
    %142 = vmatpush1.msra.mxu0 0.0
    %143 = vmatprep.subr.mxu0 0.0
    %144 = vmatpush1.msra.mxu0 0.0
    %145 = vmatprep.subr.mxu0 0.0
    %146 = vmatpush1.msra.mxu0 0.0
    %147 = vmatprep.subr.mxu0 0.0
    %148 = vmatpush1.msra.mxu0 0.0
    %149 = vmatprep.subr.mxu0 0.0
    %150 = vmatpush1.msra.mxu0 0.0
    %151 = vmatprep.subr.mxu0 0.0
    %152 = vmatpush1.msra.mxu0 0.0
    %153 = vmatprep.subr.mxu0 0.0
    %154 = vmatpush1.msra.mxu0 0.0
    %155 = vmatprep.subr.mxu0 0.0
    %156 = vmatpush1.msra.mxu0 0.0
    %157 = vmatprep.subr.mxu0 0.0
    %158 = vmatpush1.msra.mxu0 0.0
    %159 = vmatprep.mubr.f32.mxu0 0.0
    %160 = vmatmul.mubr.f32.gmra.mrb[0].mxu0 %v41
    %v161 = vpop.f32.mrb[0].mxu0
    %v162 = vadd.f32 %v94, %v161
    %v163 = vpop.f32.mrb[0].mxu0
    %164 = vdwg.mxu0
    %v165 = vmax.f32 %v162, 0.0
    %v166 = vld [vmem:[%s2 + $0x1] sm:$0x1]
    %v167 = vlaneseq
    %v168 = vshrl.u32 %v167, 7
    %v169 = vsub.s32 0, %v168
    %v170 = vrot.slane %v166, %v169
    %171 = vmatprep.subr.mxu0 0.0
    %172 = vmatpush1.msra.mxu0 %v58
    %173 = vmatprep.subr.mxu0 0.0
    %174 = vmatpush1.msra.mxu0 %v59
    %175 = vmatprep.subr.mxu0 0.0
    %176 = vmatpush1.msra.mxu0 %v60
    %177 = vmatprep.subr.mxu0 0.0
    %178 = vmatpush1.msra.mxu0 %v61
    %179 = vmatprep.subr.mxu0 0.0
    %180 = vmatpush1.msra.mxu0 %v62
    %181 = vmatprep.subr.mxu0 0.0
    %182 = vmatpush1.msra.mxu0 %v63
    %183 = vmatprep.subr.mxu0 0.0
    %184 = vmatpush1.msra.mxu0 %v64
    %185 = vmatprep.subr.mxu0 0.0
    %186 = vmatpush1.msra.mxu0 %v65
    %187 = vmatprep.subr.mxu0 0.0
    %188 = vmatpush1.msra.mxu0 %v66
    %189 = vmatprep.subr.mxu0 0.0
    %190 = vmatpush1.msra.mxu0 %v67
    %191 = vmatprep.subr.mxu0 0.0
    %192 = vmatpush1.msra.mxu0 %v68
    %193 = vmatprep.subr.mxu0 0.0
    %194 = vmatpush1.msra.mxu0 %v69
    %195 = vmatprep.subr.mxu0 0.0
    %196 = vmatpush1.msra.mxu0 %v70
    %197 = vmatprep.subr.mxu0 0.0
    %198 = vmatpush1.msra.mxu0 %v71
    %199 = vmatprep.subr.mxu0 0.0
    %200 = vmatpush1.msra.mxu0 %v72
    %201 = vmatprep.subr.mxu0 0.0
    %202 = vmatpush1.msra.mxu0 %v73
    %203 = vmatprep.subr.mxu0 0.0
    %204 = vmatpush1.msra.mxu0 0.0
    %205 = vmatprep.subr.mxu0 0.0
    %206 = vmatpush1.msra.mxu0 0.0
    %207 = vmatprep.subr.mxu0 0.0
    %208 = vmatpush1.msra.mxu0 0.0
    %209 = vmatprep.subr.mxu0 0.0
    %210 = vmatpush1.msra.mxu0 0.0
    %211 = vmatprep.subr.mxu0 0.0
    %212 = vmatpush1.msra.mxu0 0.0
    %213 = vmatprep.subr.mxu0 0.0
    %214 = vmatpush1.msra.mxu0 0.0
    %215 = vmatprep.subr.mxu0 0.0
    %216 = vmatpush1.msra.mxu0 0.0
    %217 = vmatprep.subr.mxu0 0.0
    %218 = vmatpush1.msra.mxu0 0.0
    %219 = vmatprep.subr.mxu0 0.0
    %220 = vmatpush1.msra.mxu0 0.0
    %221 = vmatprep.subr.mxu0 0.0
    %222 = vmatpush1.msra.mxu0 0.0
    %223 = vmatprep.subr.mxu0 0.0
    %224 = vmatpush1.msra.mxu0 0.0
    %225 = vmatprep.subr.mxu0 0.0
    %226 = vmatpush1.msra.mxu0 0.0
    %227 = vmatprep.subr.mxu0 0.0
    %228 = vmatpush1.msra.mxu0 0.0
    %229 = vmatprep.subr.mxu0 0.0
    %230 = vmatpush1.msra.mxu0 0.0
    %231 = vmatprep.subr.mxu0 0.0
    %232 = vmatpush1.msra.mxu0 0.0
    %233 = vmatprep.subr.mxu0 0.0
    %234 = vmatpush1.msra.mxu0 0.0
    %235 = vmatprep.mubr.f32.mxu0 0.0
    %236 = vmatmul.mubr.f32.gmra.mrb[0].mxu0 %v165
    %v237 = vpop.f32.mrb[0].mxu0
    %v238 = vadd.f32 %v170, %v237
    %v239 = vpop.f32.mrb[0].mxu0
    %240 = vdwg.mxu0
    %v241 = vmax.f32 %v238, 0.0
    %v242 = vld [vmem:[%s2 + $0x2] sm:$0x1]
    %v243 = vlaneseq
    %v244 = vshrl.u32 %v243, 7
    %v245 = vsub.s32 0, %v244
    %v246 = vrot.slane %v242, %v245
    %247 = vmatprep.subr.mxu0 0.0
    %248 = vmatpush1.msra.mxu0 %v74
    %249 = vmatprep.subr.mxu0 0.0
    %250 = vmatpush1.msra.mxu0 %v75
    %251 = vmatprep.subr.mxu0 0.0
    %252 = vmatpush1.msra.mxu0 %v76
    %253 = vmatprep.subr.mxu0 0.0
    %254 = vmatpush1.msra.mxu0 %v77
    %255 = vmatprep.subr.mxu0 0.0
    %256 = vmatpush1.msra.mxu0 %v78
    %257 = vmatprep.subr.mxu0 0.0
    %258 = vmatpush1.msra.mxu0 %v79
    %259 = vmatprep.subr.mxu0 0.0
    %260 = vmatpush1.msra.mxu0 %v80
    %261 = vmatprep.subr.mxu0 0.0
    %262 = vmatpush1.msra.mxu0 %v81
    %263 = vmatprep.subr.mxu0 0.0
    %264 = vmatpush1.msra.mxu0 %v82
    %265 = vmatprep.subr.mxu0 0.0
    %266 = vmatpush1.msra.mxu0 %v83
    %267 = vmatprep.subr.mxu0 0.0
    %268 = vmatpush1.msra.mxu0 %v84
    %269 = vmatprep.subr.mxu0 0.0
    %270 = vmatpush1.msra.mxu0 %v85
    %271 = vmatprep.subr.mxu0 0.0
    %272 = vmatpush1.msra.mxu0 %v86
    %273 = vmatprep.subr.mxu0 0.0
    %274 = vmatpush1.msra.mxu0 %v87
    %275 = vmatprep.subr.mxu0 0.0
    %276 = vmatpush1.msra.mxu0 %v88
    %277 = vmatprep.subr.mxu0 0.0
    %278 = vmatpush1.msra.mxu0 %v89
    %279 = vmatprep.subr.mxu0 0.0
    %280 = vmatpush1.msra.mxu0 0.0
    %281 = vmatprep.subr.mxu0 0.0
    %282 = vmatpush1.msra.mxu0 0.0
    %283 = vmatprep.subr.mxu0 0.0
    %284 = vmatpush1.msra.mxu0 0.0
    %285 = vmatprep.subr.mxu0 0.0
    %286 = vmatpush1.msra.mxu0 0.0
    %287 = vmatprep.subr.mxu0 0.0
    %288 = vmatpush1.msra.mxu0 0.0
    %289 = vmatprep.subr.mxu0 0.0
    %290 = vmatpush1.msra.mxu0 0.0
    %291 = vmatprep.subr.mxu0 0.0
    %292 = vmatpush1.msra.mxu0 0.0
    %293 = vmatprep.subr.mxu0 0.0
    %294 = vmatpush1.msra.mxu0 0.0
    %295 = vmatprep.subr.mxu0 0.0
    %296 = vmatpush1.msra.mxu0 0.0
    %297 = vmatprep.subr.mxu0 0.0
    %298 = vmatpush1.msra.mxu0 0.0
    %299 = vmatprep.subr.mxu0 0.0
    %300 = vmatpush1.msra.mxu0 0.0
    %301 = vmatprep.subr.mxu0 0.0
    %302 = vmatpush1.msra.mxu0 0.0
    %303 = vmatprep.subr.mxu0 0.0
    %304 = vmatpush1.msra.mxu0 0.0
    %305 = vmatprep.subr.mxu0 0.0
    %306 = vmatpush1.msra.mxu0 0.0
    %307 = vmatprep.subr.mxu0 0.0
    %308 = vmatpush1.msra.mxu0 0.0
    %309 = vmatprep.subr.mxu0 0.0
    %310 = vmatpush1.msra.mxu0 0.0
    %311 = vmatprep.mubr.f32.mxu0 0.0
    %312 = vmatmul.mubr.f32.gmra.mrb[0].mxu0 %v241
    %v313 = vpop.f32.mrb[0].mxu0
    %v314 = vadd.f32 %v246, %v313
    %v315 = vpop.f32.mrb[0].mxu0
    %316 = vdwg.mxu0
    %317 = vst [vmem:[#allocation7] sm:$0xff] %v314
    // Predicated region
    $region22: #{tpu_custom_call.1} parent=1 // pred_check
      _
    $region23: #{tpu_custom_call.1} parent=1 // pred_check_branch
      %319 = sbr.rel (0) target = $region25
    $region24: #{tpu_custom_call.1} parent=1 // pred_region
      %s321 = ssub.s32 128, 128
      %322 = vsyncadd [#allocation4], %s321
      %s324 = sshll.u32 [#allocation7], 4
      %s325 = int_to_ptr.vmem [resolvable:$true] %s324
      %327 = dma.vmem_to_hbm [thread:$0]  %s325, 128, %s3, [#allocation4]
    $region25: #{tpu_custom_call.1} parent=1 // pred_fallthru
      _
    // Predicated region
    $region26: #{tpu_custom_call.1} parent=1 // pred_check
      _
    $region27: #{tpu_custom_call.1} parent=1 // pred_check_branch
      %329 = sbr.rel (0) target = $region29
    $region28: #{tpu_custom_call.1} parent=1 // pred_region
      %330 = dma.done [#allocation4], 128
    $region29: #{tpu_custom_call.1} parent=1 // pred_fallthru
      _
    %331 = vsyncpa [#allocation3], 1
    %332 = vsyncpa [#allocation6], 1
    %333 = vsyncpa [#allocation4], 1

</llo_original>
